<compile_context>
chip_gen: v7x
topology: tpu7x:2x2x1
jax: 0.10.0
libtpu: 0.0.40
codegen_flags: <defaults>
</compile_context>

<pallas_src>
import functools

import jax
import jax.numpy as jnp
from jax.experimental import pallas as pl
from jax.experimental.pallas import tpu as pltpu


def _round_up(x, m):
    return ((x + m - 1) // m) * m


def _vmem_cap_bytes():
    try:
        return int(pltpu.get_tpu_info().vmem_capacity_bytes)
    except Exception:
        return 64 * 1024 * 1024  # conservative fallback (v7x per-TC physical)


# --------------------------------------------------------------------------- #
# Kernel
# --------------------------------------------------------------------------- #
def variation_kernel(ctx_ref, w1_ref, b1_ref, w2_ref, b2_ref,
                     wh_ref, bh_ref, eps_ref, out_ref, *, z_pad, mxu_dtype):
    # Streamed activations are cast to the MXU dtype; resident weights were
    # pre-cast in the wrapper (no per-iteration VPU pack on the weight refs).
    x = ctx_ref[...].astype(mxu_dtype)

    # fc: Linear -> Tanh -> Linear -> Tanh  (f32 accumulation on the MXU,
    # f32 elementwise on the VPU/EUP)
    h = jnp.tanh(jnp.dot(x, w1_ref[...],
                         preferred_element_type=jnp.float32) + b1_ref[...])
    h = jnp.tanh(jnp.dot(h.astype(mxu_dtype), w2_ref[...],
                         preferred_element_type=jnp.float32) + b2_ref[...])

    # fused projection heads: one [block_b, z_pad] x [z_pad, 2*z_pad] matmul
    head = jnp.dot(h.astype(mxu_dtype), wh_ref[...],
                   preferred_element_type=jnp.float32) + bh_ref[...]
    mu = head[:, :z_pad]                                   # 128-aligned slice
    logsigma = jnp.clip(head[:, z_pad:], -20.0, 20.0)

    # reparameterization (f32)
    std = jnp.exp(0.5 * logsigma)
    z = eps_ref[...].astype(jnp.float32) * std + mu

    # three direct 128-aligned lane-dense stores (no concatenate temporary)
    out_ref[:, 0:z_pad] = z.astype(out_ref.dtype)
    out_ref[:, z_pad:2 * z_pad] = mu.astype(out_ref.dtype)
    out_ref[:, 2 * z_pad:3 * z_pad] = logsigma.astype(out_ref.dtype)


# --------------------------------------------------------------------------- #
# Parameter preparation (done ONCE, outside the per-call path)
# --------------------------------------------------------------------------- #
def prepare_params(params, input_size, z_size, mxu_dtype=jnp.float32):
    """Pad feature dims to 128 lanes, fuse the mu/logsigma heads into one packed
    [z_p, 2*z_p] weight, and cast weights to the MXU dtype. Biases stay f32 (they
    are added to the f32 accumulator)."""
    f32 = jnp.float32
    in_p = _round_up(input_size, 128)
    z_p = _round_up(z_size, 128)

    w1 = jnp.zeros((in_p, z_p), f32).at[:input_size, :z_size].set(params["w1"])
    b1 = jnp.zeros((1, z_p), f32).at[:, :z_size].set(params["b1"])
    w2 = jnp.zeros((z_p, z_p), f32).at[:z_size, :z_size].set(params["w2"])
    b2 = jnp.zeros((1, z_p), f32).at[:, :z_size].set(params["b2"])
    wh = (jnp.zeros((z_p, 2 * z_p), f32)
          .at[:z_size, :z_size].set(params["w_mu"])
          .at[:z_size, z_p:z_p + z_size].set(params["w_ls"]))
    bh = (jnp.zeros((1, 2 * z_p), f32)
          .at[:, :z_size].set(params["b_mu"])
          .at[:, z_p:z_p + z_size].set(params["b_ls"]))

    return {
        "w1": w1.astype(mxu_dtype), "b1": b1,
        "w2": w2.astype(mxu_dtype), "b2": b2,
        "wh": wh.astype(mxu_dtype), "bh": bh,
        "input_size": input_size, "z_size": z_size,
        "in_p": in_p, "z_p": z_p, "mxu_dtype": mxu_dtype,
    }


def _choose_batch_tiling(B, row_align, target_block=1024):
    """Pick the number of tiles first (avoids ~2x row padding for unlucky B),
    then the tile size. Prefer >=2 tiles so a 'parallel' grid axis can split
    across v7x's two TensorCores; free on single-TC v5e/v6e."""
    nt = max(1, pl.cdiv(B, target_block))
    if nt < 2 and B >= 2 * row_align:
        nt = 2
    block_b = _round_up(pl.cdiv(B, nt), row_align)
    b_p = nt * block_b
    return nt, block_b, b_p


def _maybe_pad_2d(x, rows, cols, dtype):
    """Zero-pad / cast only when actually needed (skips the HBM round trip for
    already-aligned production shapes)."""
    B, C = x.shape
    if B == rows and C == cols:
        return x.astype(dtype)
    return jnp.zeros((rows, cols), dtype).at[:B, :C].set(x.astype(dtype))


# --------------------------------------------------------------------------- #
# Forward wrapper
# --------------------------------------------------------------------------- #
def variation_forward(context, prepared, epsilon, *, target_block=1024):
    """context: [B, input_size]; prepared: output of prepare_params;
    epsilon: [B, z_size]. Returns (z, mu, logsigma), each [B, z_size] in the
    stream dtype (f32 when mxu_dtype=f32, bf16 when mxu_dtype=bf16)."""
    B = context.shape[0]
    input_size = prepared["input_size"]
    z_size = prepared["z_size"]
    in_p, z_p = prepared["in_p"], prepared["z_p"]
    mxu_dtype = prepared["mxu_dtype"]

    # Streams (context / epsilon / packed output) travel in the MXU dtype:
    # bf16 halves HBM bytes in the mem-bound regime; math stays f32 in-kernel.
    stream_dtype = mxu_dtype
    itemsize = jnp.dtype(stream_dtype).itemsize
    row_align = 16 if itemsize < 4 else 8          # bf16 packs 16 sublanes/vreg

    nt, block_b, b_p = _choose_batch_tiling(B, row_align, target_block)

    ctx_p = _maybe_pad_2d(context, b_p, in_p, stream_dtype)
    eps_p = _maybe_pad_2d(epsilon, b_p, z_p, stream_dtype)

    # VMEM bid: double-buffered streamed tiles + resident weights, with headroom,
    # clamped to 75% of the per-core VMEM capacity (never the full 64 MiB on v7x).
    w_itemsize = jnp.dtype(mxu_dtype).itemsize
    weight_bytes = ((in_p * z_p + z_p * z_p + z_p * 2 * z_p) * w_itemsize
                    + 6 * z_p * 4)                                  # f32 biases
    io_bytes = block_b * (in_p + z_p + 3 * z_p) * itemsize
    budget = 2 * weight_bytes + 2 * io_bytes + (4 << 20)
    vmem_limit = int(min(max(budget, 8 << 20), (3 * _vmem_cap_bytes()) // 4))

    kernel = functools.partial(variation_kernel, z_pad=z_p, mxu_dtype=mxu_dtype)

    out = pl.pallas_call(
        kernel,
        out_shape=jax.ShapeDtypeStruct((b_p, 3 * z_p), stream_dtype),
        grid_spec=pltpu.PrefetchScalarGridSpec(
            num_scalar_prefetch=0,
            grid=(nt,),
            in_specs=[
                pl.BlockSpec((block_b, in_p), lambda i: (i, 0)),    # context tile
                pl.BlockSpec((in_p, z_p), lambda i: (0, 0)),        # w1 (resident)
                pl.BlockSpec((1, z_p), lambda i: (0, 0)),           # b1
                pl.BlockSpec((z_p, z_p), lambda i: (0, 0)),         # w2
                pl.BlockSpec((1, z_p), lambda i: (0, 0)),           # b2
                pl.BlockSpec((z_p, 2 * z_p), lambda i: (0, 0)),     # fused head W
                pl.BlockSpec((1, 2 * z_p), lambda i: (0, 0)),       # fused head b
                pl.BlockSpec((block_b, z_p), lambda i: (i, 0)),     # epsilon tile
            ],
            out_specs=pl.BlockSpec((block_b, 3 * z_p), lambda i: (i, 0)),
        ),
        compiler_params=pltpu.CompilerParams(
            dimension_semantics=("parallel",),
            vmem_limit_bytes=vmem_limit,
        ),
    )(ctx_p, prepared["w1"], prepared["b1"], prepared["w2"], prepared["b2"],
      prepared["wh"], prepared["bh"], eps_p)

    # strip padding / unpack the lane-dense slab [z | mu | logsigma]
    z = out[:B, 0:z_size]
    mu = out[:B, z_p:z_p + z_size]
    logsigma = out[:B, 2 * z_p:2 * z_p + z_size]
    return z, mu, logsigma


# --------------------------------------------------------------------------- #
# Init + pure-JAX reference
# --------------------------------------------------------------------------- #
def init_params(key, input_size, z_size):
    """Mirrors Variation.init_weights: weights ~ U(-0.02, 0.02), biases = 0.
    Weights stored pre-transposed as [in, out]."""
    k1, k2, k3, k4 = jax.random.split(key, 4)
    u = lambda k, shape: jax.random.uniform(k, shape, jnp.float32, -0.02, 0.02)
    return {
        "w1": u(k1, (input_size, z_size)), "b1": jnp.zeros((1, z_size), jnp.float32),
        "w2": u(k2, (z_size, z_size)),     "b2": jnp.zeros((1, z_size), jnp.float32),
        "w_mu": u(k3, (z_size, z_size)),   "b_mu": jnp.zeros((1, z_size), jnp.float32),
        "w_ls": u(k4, (z_size, z_size)),   "b_ls": jnp.zeros((1, z_size), jnp.float32),
    }


def reference_forward(context, params, epsilon):
    h = jnp.tanh(context @ params["w1"] + params["b1"])
    h = jnp.tanh(h @ params["w2"] + params["b2"])
    mu = h @ params["w_mu"] + params["b_mu"]
    logsigma = jnp.clip(h @ params["w_ls"] + params["b_ls"], -20.0, 20.0)
    std = jnp.exp(0.5 * logsigma)
    z = epsilon * std + mu
    return z, mu, logsigma


if __name__ == "__main__":
    B = 8
    INPUT_SIZE = 32
    Z_SIZE = 32

    key = jax.random.PRNGKey(0)
    k_ctx, k_eps, k_params = jax.random.split(key, 3)

    context = jax.random.normal(k_ctx, (B, INPUT_SIZE), jnp.float32)
    epsilon = jax.random.normal(k_eps, (B, Z_SIZE), jnp.float32)
    params = init_params(k_params, INPUT_SIZE, Z_SIZE)

    z_ref, mu_ref, ls_ref = reference_forward(context, params, epsilon)

    # ---- f32 path: bit-tight against the pure-JAX reference -----------------
    prep_f32 = prepare_params(params, INPUT_SIZE, Z_SIZE, mxu_dtype=jnp.float32)
    z, mu, logsigma = variation_forward(context, prep_f32, epsilon)
    jax.block_until_ready((z, mu, logsigma))
    assert z.shape == (B, Z_SIZE) and mu.shape == (B, Z_SIZE) and logsigma.shape == (B, Z_SIZE)
    assert jnp.allclose(z, z_ref, atol=1e-5), "z mismatch (f32)"
    assert jnp.allclose(mu, mu_ref, atol=1e-5), "mu mismatch (f32)"
    assert jnp.allclose(logsigma, ls_ref, atol=1e-5), "logsigma mismatch (f32)"

    # ---- bf16 production path: half the HBM bytes, f32 accumulation ---------
    prep_bf16 = prepare_params(params, INPUT_SIZE, Z_SIZE, mxu_dtype=jnp.bfloat16)
    zb, mub, lsb = variation_forward(context, prep_bf16, epsilon)
    jax.block_until_ready((zb, mub, lsb))
    f32 = jnp.float32
    assert jnp.allclose(zb.astype(f32), z_ref, atol=6e-2, rtol=5e-2), "z mismatch (bf16)"
    assert jnp.allclose(mub.astype(f32), mu_ref, atol=6e-2, rtol=5e-2), "mu mismatch (bf16)"
    assert jnp.allclose(lsb.astype(f32), ls_ref, atol=6e-2, rtol=5e-2), "logsigma mismatch (bf16)"

    print("KERNEL_OK")
</pallas_src>

<mosaic_0001>
module attributes {stable_mosaic.version = 11 : i64} {
  func.func @variation_kernel(%arg0: i32, %arg1: memref<8x128xf32, #tpu.memory_space<vmem>>, %arg2: memref<128x128xf32, #tpu.memory_space<vmem>>, %arg3: memref<1x128xf32, #tpu.memory_space<vmem>>, %arg4: memref<128x128xf32, #tpu.memory_space<vmem>>, %arg5: memref<1x128xf32, #tpu.memory_space<vmem>>, %arg6: memref<128x256xf32, #tpu.memory_space<vmem>>, %arg7: memref<1x256xf32, #tpu.memory_space<vmem>>, %arg8: memref<8x128xf32, #tpu.memory_space<vmem>>, %arg9: memref<8x384xf32, #tpu.memory_space<vmem>>) attributes {dimension_semantics = [#tpu.dimension_semantics<parallel>], iteration_bounds = array<i64: 1>, scalar_prefetch = 0 : i64, scratch_operands = 0 : i64, tpu.core_type = #tpu.core_type<tc>, window_params = [{transform_indices = @transform_0, window_bounds = array<i64: 8, 128>}, {pipeline_mode = #tpu.pipeline_mode<synchronous>, transform_indices = @transform_1, window_bounds = array<i64: 128, 128>}, {pipeline_mode = #tpu.pipeline_mode<synchronous>, transform_indices = @transform_2, window_bounds = array<i64: 1, 128>}, {pipeline_mode = #tpu.pipeline_mode<synchronous>, transform_indices = @transform_3, window_bounds = array<i64: 128, 128>}, {pipeline_mode = #tpu.pipeline_mode<synchronous>, transform_indices = @transform_4, window_bounds = array<i64: 1, 128>}, {pipeline_mode = #tpu.pipeline_mode<synchronous>, transform_indices = @transform_5, window_bounds = array<i64: 128, 256>}, {pipeline_mode = #tpu.pipeline_mode<synchronous>, transform_indices = @transform_6, window_bounds = array<i64: 1, 256>}, {transform_indices = @transform_7, window_bounds = array<i64: 8, 128>}, {transform_indices = @transform_8, window_bounds = array<i64: 8, 384>}]} {
    %c0 = arith.constant 0 : index
    %c0_0 = arith.constant 0 : index
    %0 = vector.load %arg1[%c0, %c0_0] : memref<8x128xf32, #tpu.memory_space<vmem>>, vector<8x128xf32>
    %c0_1 = arith.constant 0 : index
    %c0_2 = arith.constant 0 : index
    %1 = vector.load %arg2[%c0_1, %c0_2] : memref<128x128xf32, #tpu.memory_space<vmem>>, vector<128x128xf32>
    %cst = arith.constant dense<0.000000e+00> : vector<8x128xf32>
    %2 = tpu.matmul %0, %1, %cst {dimension_numbers = #tpu.dot_dimension_numbers<[1], [0], [0], [1], [0, 0, 1, 1], [], []>} : vector<8x128xf32>, vector<128x128xf32>, vector<8x128xf32> -> vector<8x128xf32>
    %c0_3 = arith.constant 0 : index
    %c0_4 = arith.constant 0 : index
    %3 = vector.load %arg3[%c0_3, %c0_4] : memref<1x128xf32, #tpu.memory_space<vmem>>, vector<1x128xf32>
    %4 = vector.broadcast %3 : vector<1x128xf32> to vector<8x128xf32>
    %5 = arith.addf %2, %4 : vector<8x128xf32>
    %6 = math.tanh %5 : vector<8x128xf32>
    %c0_5 = arith.constant 0 : index
    %c0_6 = arith.constant 0 : index
    %7 = vector.load %arg4[%c0_5, %c0_6] : memref<128x128xf32, #tpu.memory_space<vmem>>, vector<128x128xf32>
    %cst_7 = arith.constant dense<0.000000e+00> : vector<8x128xf32>
    %8 = tpu.matmul %6, %7, %cst_7 {dimension_numbers = #tpu.dot_dimension_numbers<[1], [0], [0], [1], [0, 0, 1, 1], [], []>} : vector<8x128xf32>, vector<128x128xf32>, vector<8x128xf32> -> vector<8x128xf32>
    %c0_8 = arith.constant 0 : index
    %c0_9 = arith.constant 0 : index
    %9 = vector.load %arg5[%c0_8, %c0_9] : memref<1x128xf32, #tpu.memory_space<vmem>>, vector<1x128xf32>
    %10 = vector.broadcast %9 : vector<1x128xf32> to vector<8x128xf32>
    %11 = arith.addf %8, %10 : vector<8x128xf32>
    %12 = math.tanh %11 : vector<8x128xf32>
    %c0_10 = arith.constant 0 : index
    %c0_11 = arith.constant 0 : index
    %13 = vector.load %arg6[%c0_10, %c0_11] : memref<128x256xf32, #tpu.memory_space<vmem>>, vector<128x256xf32>
    %cst_12 = arith.constant dense<0.000000e+00> : vector<8x256xf32>
    %14 = tpu.matmul %12, %13, %cst_12 {dimension_numbers = #tpu.dot_dimension_numbers<[1], [0], [0], [1], [0, 0, 1, 1], [], []>} : vector<8x128xf32>, vector<128x256xf32>, vector<8x256xf32> -> vector<8x256xf32>
    %c0_13 = arith.constant 0 : index
    %c0_14 = arith.constant 0 : index
    %15 = vector.load %arg7[%c0_13, %c0_14] : memref<1x256xf32, #tpu.memory_space<vmem>>, vector<1x256xf32>
    %16 = vector.broadcast %15 : vector<1x256xf32> to vector<8x256xf32>
    %17 = arith.addf %14, %16 : vector<8x256xf32>
    %18 = vector.extract_strided_slice %17 {offsets = [0, 0], sizes = [8, 128], strides = [1, 1]} : vector<8x256xf32> to vector<8x128xf32>
    %19 = vector.extract_strided_slice %17 {offsets = [0, 128], sizes = [8, 128], strides = [1, 1]} : vector<8x256xf32> to vector<8x128xf32>
    %cst_15 = arith.constant -2.000000e+01 : f32
    %cst_16 = arith.constant 2.000000e+01 : f32
    %20 = vector.broadcast %cst_15 : f32 to vector<8x128xf32>
    %21 = arith.maximumf %20, %19 : vector<8x128xf32>
    %22 = vector.broadcast %cst_16 : f32 to vector<8x128xf32>
    %23 = arith.minimumf %22, %21 : vector<8x128xf32>
    %cst_17 = arith.constant 5.000000e-01 : f32
    %24 = vector.broadcast %cst_17 : f32 to vector<8x128xf32>
    %25 = arith.mulf %24, %23 : vector<8x128xf32>
    %26 = math.exp %25 : vector<8x128xf32>
    %c0_18 = arith.constant 0 : index
    %c0_19 = arith.constant 0 : index
    %27 = vector.load %arg8[%c0_18, %c0_19] : memref<8x128xf32, #tpu.memory_space<vmem>>, vector<8x128xf32>
    %28 = arith.mulf %27, %26 : vector<8x128xf32>
    %29 = arith.addf %28, %18 : vector<8x128xf32>
    %c0_20 = arith.constant 0 : index
    %c0_21 = arith.constant 0 : index
    %30 = vector.load %arg9[%c0_20, %c0_21] : memref<8x384xf32, #tpu.memory_space<vmem>>, vector<8x128xf32>
    tpu.vector_store %arg9[%c0_20, %c0_21], %29 {strides = array<i32>} : memref<8x384xf32, #tpu.memory_space<vmem>>, vector<8x128xf32>,
    %c0_22 = arith.constant 0 : index
    %c128 = arith.constant 128 : index
    %31 = vector.load %arg9[%c0_22, %c128] : memref<8x384xf32, #tpu.memory_space<vmem>>, vector<8x128xf32>
    tpu.vector_store %arg9[%c0_22, %c128], %18 {strides = array<i32>} : memref<8x384xf32, #tpu.memory_space<vmem>>, vector<8x128xf32>,
    %c0_23 = arith.constant 0 : index
    %c256 = arith.constant 256 : index
    %32 = vector.load %arg9[%c0_23, %c256] : memref<8x384xf32, #tpu.memory_space<vmem>>, vector<8x128xf32>
    tpu.vector_store %arg9[%c0_23, %c256], %23 {strides = array<i32>} : memref<8x384xf32, #tpu.memory_space<vmem>>, vector<8x128xf32>,
    return
  }
  func.func @transform_0(%arg0: i32) -> (i32, i32) {
    %c0_i32 = arith.constant 0 : i32
    %c0_i32_0 = arith.constant 0 : i32
    return %arg0, %c0_i32 : i32, i32
  }
  func.func @transform_1(%arg0: i32) -> (i32, i32) {
    %c0_i32 = arith.constant 0 : i32
    %c0_i32_0 = arith.constant 0 : i32
    %c0_i32_1 = arith.constant 0 : i32
    return %c0_i32, %c0_i32_0 : i32, i32
  }
  func.func @transform_2(%arg0: i32) -> (i32, i32) {
    %c0_i32 = arith.constant 0 : i32
    %c0_i32_0 = arith.constant 0 : i32
    %c0_i32_1 = arith.constant 0 : i32
    return %c0_i32, %c0_i32_0 : i32, i32
  }
  func.func @transform_3(%arg0: i32) -> (i32, i32) {
    %c0_i32 = arith.constant 0 : i32
    %c0_i32_0 = arith.constant 0 : i32
    %c0_i32_1 = arith.constant 0 : i32
    return %c0_i32, %c0_i32_0 : i32, i32
  }
  func.func @transform_4(%arg0: i32) -> (i32, i32) {
    %c0_i32 = arith.constant 0 : i32
    %c0_i32_0 = arith.constant 0 : i32
    %c0_i32_1 = arith.constant 0 : i32
    return %c0_i32, %c0_i32_0 : i32, i32
  }
  func.func @transform_5(%arg0: i32) -> (i32, i32) {
    %c0_i32 = arith.constant 0 : i32
    %c0_i32_0 = arith.constant 0 : i32
    %c0_i32_1 = arith.constant 0 : i32
    return %c0_i32, %c0_i32_0 : i32, i32
  }
  func.func @transform_6(%arg0: i32) -> (i32, i32) {
    %c0_i32 = arith.constant 0 : i32
    %c0_i32_0 = arith.constant 0 : i32
    %c0_i32_1 = arith.constant 0 : i32
    return %c0_i32, %c0_i32_0 : i32, i32
  }
  func.func @transform_7(%arg0: i32) -> (i32, i32) {
    %c0_i32 = arith.constant 0 : i32
    %c0_i32_0 = arith.constant 0 : i32
    return %arg0, %c0_i32 : i32, i32
  }
  func.func @transform_8(%arg0: i32) -> (i32, i32) {
    %c0_i32 = arith.constant 0 : i32
    %c0_i32_0 = arith.constant 0 : i32
    return %arg0, %c0_i32 : i32, i32
  }
}

</mosaic_0001>

<llo_original>
// kernel: tpu_custom_call.1
$region0: #{tpu_custom_call.1}
  #allocation0 [shape = 'u32[]', space=smem, size = 0x4, offset = 0x4, fixed_abs, tag = 'smem constant byte address 0x4 - core index']
  #allocation1 [shape = 'u32[144,128]{1,0:T(1,128)}', space=vmem, size = 0x12000, scoped, tag = 'internal scratch']
  %s0 = inlined_call_operand.hbm [shape: f32[8,128], index: 0, kind: input, shape index: {}]
  %s1 = inlined_call_operand.hbm [shape: f32[128,128], index: 1, kind: input, shape index: {}]
  %s2 = inlined_call_operand.vmem [shape: f32[1,128], index: 2, kind: input, shape index: {}]
  %s3 = inlined_call_operand.hbm [shape: f32[128,128], index: 3, kind: input, shape index: {}]
  %s4 = inlined_call_operand.vmem [shape: f32[1,128], index: 4, kind: input, shape index: {}]
  %s5 = inlined_call_operand.hbm [shape: f32[128,256], index: 5, kind: input, shape index: {}]
  %s6 = inlined_call_operand.vmem [shape: f32[1,256], index: 6, kind: input, shape index: {}]
  %s7 = inlined_call_operand.vmem [shape: f32[8,128], index: 7, kind: input, shape index: {}]
  %s8 = inlined_call_operand.hbm [shape: f32[8,384], index: 8, kind: output, shape index: {}]
  %s9 = sld [smem:[#allocation0]]
  $region58: #{tpu_custom_call.1} parent=0
    _
  %s11 = ssub.s32 1, %s9
  %s12 = scalar_select 0, %s11, %s9
  $region1: #{tpu_custom_call.1} parent=0
    #allocation2 [shape = 'u8[4096]{0}', space=vmem, size = 0x1000, scoped, tag = 'input window, operand 0, single buffered']
    #allocation3 [shape = 's32[1]{0}', space=sflag, size = 0x4, scoped, tag = 'scoped memory for tpu_custom_call.1']
    #allocation4 [shape = 's32[1]{0}', space=sflag, size = 0x4, scoped, tag = 'scoped memory for tpu_custom_call.1']
    #allocation5 [shape = 'u8[65536]{0}', space=vmem, size = 0x10000, scoped, tag = 'input window, operand 1, single buffered']
    #allocation6 [shape = 's32[1]{0}', space=sflag, size = 0x4, scoped, tag = 'scoped memory for tpu_custom_call.1']
    #allocation7 [shape = 'u8[65536]{0}', space=vmem, size = 0x10000, scoped, tag = 'input window, operand 3, single buffered']
    #allocation8 [shape = 'u8[131072]{0}', space=vmem, size = 0x20000, scoped, tag = 'input window, operand 5, single buffered']
    #allocation9 [shape = 's32[1]{0}', space=sflag, size = 0x4, scoped, tag = 'scoped memory for tpu_custom_call.1']
    #allocation10 [shape = 'u8[12288]{0}', space=vmem, size = 0x3000, scoped, tag = 'output window, operand 0, single buffered']
    %13 = vsyncpa [#allocation3], 0
    %14 = vsyncpa [#allocation6], 0
    %15 = vsyncpa [#allocation9], 0
    %16 = vsyncpa [#allocation4], 0
    // Predicated region
    $region2: #{tpu_custom_call.1} parent=1 // pred_check
      _
    $region3: #{tpu_custom_call.1} parent=1 // pred_check_branch
      %18 = sbr.rel (0) target = $region5
    $region4: #{tpu_custom_call.1} parent=1 // pred_region
      %s20 = ssub.s32 128, 128
      %21 = vsyncadd [#allocation3], %s20
      %s23 = sshll.u32 [#allocation2], 4
      %s24 = int_to_ptr.vmem [resolvable:$true] %s23
      %26 = dma.hbm_to_vmem [thread:$0]  %s0, 128, %s24, [#allocation3]
    $region5: #{tpu_custom_call.1} parent=1 // pred_fallthru
      _
    // Predicated region
    $region6: #{tpu_custom_call.1} parent=1 // pred_check
      _
    $region7: #{tpu_custom_call.1} parent=1 // pred_check_branch
      %28 = sbr.rel (0) target = $region9
    $region8: #{tpu_custom_call.1} parent=1 // pred_region
      %s30 = ssub.s32 2048, 2048
      %31 = vsyncadd [#allocation6], %s30
      %s32 = sshll.u32 [#allocation5], 4
      %s33 = int_to_ptr.vmem [resolvable:$true] %s32
      %38 = dma.hbm_to_vmem [thread:$0]  %s1, 2048, %s33, [#allocation6], 128, 128, 8
    $region9: #{tpu_custom_call.1} parent=1 // pred_fallthru
      _
    // Predicated region
    $region10: #{tpu_custom_call.1} parent=1 // pred_check
      _
    $region11: #{tpu_custom_call.1} parent=1 // pred_check_branch
      %40 = sbr.rel (0) target = $region13
    $region12: #{tpu_custom_call.1} parent=1 // pred_region
      _
    $region13: #{tpu_custom_call.1} parent=1 // pred_fallthru
      _
    // Predicated region
    $region14: #{tpu_custom_call.1} parent=1 // pred_check
      _
    $region15: #{tpu_custom_call.1} parent=1 // pred_check_branch
      %42 = sbr.rel (0) target = $region17
    $region16: #{tpu_custom_call.1} parent=1 // pred_region
      %s44 = ssub.s32 2048, 2048
      %45 = vsyncadd [#allocation6], %s44
      %s46 = sshll.u32 [#allocation7], 4
      %s47 = int_to_ptr.vmem [resolvable:$true] %s46
      %52 = dma.hbm_to_vmem [thread:$0]  %s3, 2048, %s47, [#allocation6], 128, 128, 8
    $region17: #{tpu_custom_call.1} parent=1 // pred_fallthru
      _
    // Predicated region
    $region18: #{tpu_custom_call.1} parent=1 // pred_check
      _
    $region19: #{tpu_custom_call.1} parent=1 // pred_check_branch
      %54 = sbr.rel (0) target = $region21
    $region20: #{tpu_custom_call.1} parent=1 // pred_region
      _
    $region21: #{tpu_custom_call.1} parent=1 // pred_fallthru
      _
    // Predicated region
    $region22: #{tpu_custom_call.1} parent=1 // pred_check
      _
    $region23: #{tpu_custom_call.1} parent=1 // pred_check_branch
      %56 = sbr.rel (0) target = $region25
    $region24: #{tpu_custom_call.1} parent=1 // pred_region
      %s58 = ssub.s32 4096, 4096
      %59 = vsyncadd [#allocation9], %s58
      %s60 = sshll.u32 [#allocation8], 4
      %s61 = int_to_ptr.vmem [resolvable:$true] %s60
      %66 = dma.hbm_to_vmem [thread:$0]  %s5, 4096, %s61, [#allocation9], 256, 256, 16
    $region25: #{tpu_custom_call.1} parent=1 // pred_fallthru
      _
    // Predicated region
    $region26: #{tpu_custom_call.1} parent=1 // pred_check
      _
    $region27: #{tpu_custom_call.1} parent=1 // pred_check_branch
      %68 = sbr.rel (0) target = $region29
    $region28: #{tpu_custom_call.1} parent=1 // pred_region
      _
    $region29: #{tpu_custom_call.1} parent=1 // pred_fallthru
      _
    // Predicated region
    $region30: #{tpu_custom_call.1} parent=1 // pred_check
      _
    $region31: #{tpu_custom_call.1} parent=1 // pred_check_branch
      %70 = sbr.rel (0) target = $region33
    $region32: #{tpu_custom_call.1} parent=1 // pred_region
      _
    $region33: #{tpu_custom_call.1} parent=1 // pred_fallthru
      _
    // Predicated region
    $region34: #{tpu_custom_call.1} parent=1 // pred_check
      _
    $region35: #{tpu_custom_call.1} parent=1 // pred_check_branch
      %72 = sbr.rel (0) target = $region37
    $region36: #{tpu_custom_call.1} parent=1 // pred_region
      %73 = dma.done [#allocation3], 128
    $region37: #{tpu_custom_call.1} parent=1 // pred_fallthru
      _
    // Predicated region
    $region38: #{tpu_custom_call.1} parent=1 // pred_check
      _
    $region39: #{tpu_custom_call.1} parent=1 // pred_check_branch
      %75 = sbr.rel (0) target = $region41
    $region40: #{tpu_custom_call.1} parent=1 // pred_region
      %76 = dma.done [#allocation6], 2048
    $region41: #{tpu_custom_call.1} parent=1 // pred_fallthru
      _
    // Predicated region
    $region42: #{tpu_custom_call.1} parent=1 // pred_check
      _
    $region43: #{tpu_custom_call.1} parent=1 // pred_check_branch
      %78 = sbr.rel (0) target = $region45
    $region44: #{tpu_custom_call.1} parent=1 // pred_region
      %79 = dma.done [#allocation6], 2048
    $region45: #{tpu_custom_call.1} parent=1 // pred_fallthru
      _
    // Predicated region
    $region46: #{tpu_custom_call.1} parent=1 // pred_check
      _
    $region47: #{tpu_custom_call.1} parent=1 // pred_check_branch
      %81 = sbr.rel (0) target = $region49
    $region48: #{tpu_custom_call.1} parent=1 // pred_region
      %82 = dma.done [#allocation9], 4096
    $region49: #{tpu_custom_call.1} parent=1 // pred_fallthru
      _
    %v83 = vld [vmem:[#allocation2] sm:$0xff]
    %v84 = vld [vmem:[#allocation5] sm:$0xff]
    %v85 = vld [vmem:[#allocation5 + $0x8] sm:$0xff]
    %v86 = vld [vmem:[#allocation5 + $0x10] sm:$0xff]
    %v87 = vld [vmem:[#allocation5 + $0x18] sm:$0xff]
    %v88 = vld [vmem:[#allocation5 + $0x20] sm:$0xff]
    %v89 = vld [vmem:[#allocation5 + $0x28] sm:$0xff]
    %v90 = vld [vmem:[#allocation5 + $0x30] sm:$0xff]
    %v91 = vld [vmem:[#allocation5 + $0x38] sm:$0xff]
    %v92 = vld [vmem:[#allocation5 + $0x40] sm:$0xff]
    %v93 = vld [vmem:[#allocation5 + $0x48] sm:$0xff]
    %v94 = vld [vmem:[#allocation5 + $0x50] sm:$0xff]
    %v95 = vld [vmem:[#allocation5 + $0x58] sm:$0xff]
    %v96 = vld [vmem:[#allocation5 + $0x60] sm:$0xff]
    %v97 = vld [vmem:[#allocation5 + $0x68] sm:$0xff]
    %v98 = vld [vmem:[#allocation5 + $0x70] sm:$0xff]
    %v99 = vld [vmem:[#allocation5 + $0x78] sm:$0xff]
    %v100 = vld [vmem:[%s2] sm:$0x1]
    %v102 = vlaneseq
    %v103 = vshrl.u32 %v102, 7
    %v104 = vsub.s32 0, %v103
    %v105 = vrot.slane %v100, %v104
    %107 = vmatprep.subr.mxu0 0.0
    %108 = vmatpush1.msra.mxu0 %v84
    %109 = vmatprep.subr.mxu0 0.0
    %110 = vmatpush1.msra.mxu0 %v85
    %111 = vmatprep.subr.mxu0 0.0
    %112 = vmatpush1.msra.mxu0 %v86
    %113 = vmatprep.subr.mxu0 0.0
    %114 = vmatpush1.msra.mxu0 %v87
    %115 = vmatprep.subr.mxu0 0.0
    %116 = vmatpush1.msra.mxu0 %v88
    %117 = vmatprep.subr.mxu0 0.0
    %118 = vmatpush1.msra.mxu0 %v89
    %119 = vmatprep.subr.mxu0 0.0
    %120 = vmatpush1.msra.mxu0 %v90
    %121 = vmatprep.subr.mxu0 0.0
    %122 = vmatpush1.msra.mxu0 %v91
    %123 = vmatprep.subr.mxu0 0.0
    %124 = vmatpush1.msra.mxu0 %v92
    %125 = vmatprep.subr.mxu0 0.0
    %126 = vmatpush1.msra.mxu0 %v93
    %127 = vmatprep.subr.mxu0 0.0
    %128 = vmatpush1.msra.mxu0 %v94
    %129 = vmatprep.subr.mxu0 0.0
    %130 = vmatpush1.msra.mxu0 %v95
    %131 = vmatprep.subr.mxu0 0.0
    %132 = vmatpush1.msra.mxu0 %v96
    %133 = vmatprep.subr.mxu0 0.0
    %134 = vmatpush1.msra.mxu0 %v97
    %135 = vmatprep.subr.mxu0 0.0
    %136 = vmatpush1.msra.mxu0 %v98
    %137 = vmatprep.subr.mxu0 0.0
    %138 = vmatpush1.msra.mxu0 %v99
    %139 = vmatprep.subr.mxu0 0.0
    %140 = vmatpush1.msra.mxu0 0.0
    %141 = vmatprep.subr.mxu0 0.0
    %142 = vmatpush1.msra.mxu0 0.0
    %143 = vmatprep.subr.mxu0 0.0
    %144 = vmatpush1.msra.mxu0 0.0
    %145 = vmatprep.subr.mxu0 0.0
    %146 = vmatpush1.msra.mxu0 0.0
    %147 = vmatprep.subr.mxu0 0.0
    %148 = vmatpush1.msra.mxu0 0.0
    %149 = vmatprep.subr.mxu0 0.0
    %150 = vmatpush1.msra.mxu0 0.0
    %151 = vmatprep.subr.mxu0 0.0
    %152 = vmatpush1.msra.mxu0 0.0
    %153 = vmatprep.subr.mxu0 0.0
    %154 = vmatpush1.msra.mxu0 0.0
    %155 = vmatprep.subr.mxu0 0.0
    %156 = vmatpush1.msra.mxu0 0.0
    %157 = vmatprep.subr.mxu0 0.0
    %158 = vmatpush1.msra.mxu0 0.0
    %159 = vmatprep.subr.mxu0 0.0
    %160 = vmatpush1.msra.mxu0 0.0
    %161 = vmatprep.subr.mxu0 0.0
    %162 = vmatpush1.msra.mxu0 0.0
    %163 = vmatprep.subr.mxu0 0.0
    %164 = vmatpush1.msra.mxu0 0.0
    %165 = vmatprep.subr.mxu0 0.0
    %166 = vmatpush1.msra.mxu0 0.0
    %167 = vmatprep.subr.mxu0 0.0
    %168 = vmatpush1.msra.mxu0 0.0
    %169 = vmatprep.subr.mxu0 0.0
    %170 = vmatpush1.msra.mxu0 0.0
    %171 = vmatprep.mubr.f32.mxu0 0.0
    %172 = vmatmul.mubr.f32.gmra.mrb[0].mxu0 %v83
    %v173 = vpop.f32.mrb[0].mxu0
    %v174 = vadd.f32 %v105, %v173
    %v175 = vpop.f32.mrb[0].mxu0
    %176 = vdwg.mxu0
    %v177 = vtanh.pop %v174
    %v178 = vld [vmem:[#allocation7] sm:$0xff]
    %v179 = vld [vmem:[#allocation7 + $0x8] sm:$0xff]
    %v180 = vld [vmem:[#allocation7 + $0x10] sm:$0xff]
    %v181 = vld [vmem:[#allocation7 + $0x18] sm:$0xff]
    %v182 = vld [vmem:[#allocation7 + $0x20] sm:$0xff]
    %v183 = vld [vmem:[#allocation7 + $0x28] sm:$0xff]
    %v184 = vld [vmem:[#allocation7 + $0x30] sm:$0xff]
    %v185 = vld [vmem:[#allocation7 + $0x38] sm:$0xff]
    %v186 = vld [vmem:[#allocation7 + $0x40] sm:$0xff]
    %v187 = vld [vmem:[#allocation7 + $0x48] sm:$0xff]
    %v188 = vld [vmem:[#allocation7 + $0x50] sm:$0xff]
    %v189 = vld [vmem:[#allocation7 + $0x58] sm:$0xff]
    %v190 = vld [vmem:[#allocation7 + $0x60] sm:$0xff]
    %v191 = vld [vmem:[#allocation7 + $0x68] sm:$0xff]
    %v192 = vld [vmem:[#allocation7 + $0x70] sm:$0xff]
    %v193 = vld [vmem:[#allocation7 + $0x78] sm:$0xff]
    %v194 = vld [vmem:[%s4] sm:$0x1]
    %v196 = vlaneseq
    %v197 = vshrl.u32 %v196, 7
    %v198 = vsub.s32 0, %v197
    %v199 = vrot.slane %v194, %v198
    %201 = vmatprep.subr.mxu0 0.0
    %202 = vmatpush1.msra.mxu0 %v178
    %203 = vmatprep.subr.mxu0 0.0
    %204 = vmatpush1.msra.mxu0 %v179
    %205 = vmatprep.subr.mxu0 0.0
    %206 = vmatpush1.msra.mxu0 %v180
    %207 = vmatprep.subr.mxu0 0.0
    %208 = vmatpush1.msra.mxu0 %v181
    %209 = vmatprep.subr.mxu0 0.0
    %210 = vmatpush1.msra.mxu0 %v182
    %211 = vmatprep.subr.mxu0 0.0
    %212 = vmatpush1.msra.mxu0 %v183
    %213 = vmatprep.subr.mxu0 0.0
    %214 = vmatpush1.msra.mxu0 %v184
    %215 = vmatprep.subr.mxu0 0.0
    %216 = vmatpush1.msra.mxu0 %v185
    %217 = vmatprep.subr.mxu0 0.0
    %218 = vmatpush1.msra.mxu0 %v186
    %219 = vmatprep.subr.mxu0 0.0
    %220 = vmatpush1.msra.mxu0 %v187
    %221 = vmatprep.subr.mxu0 0.0
    %222 = vmatpush1.msra.mxu0 %v188
    %223 = vmatprep.subr.mxu0 0.0
    %224 = vmatpush1.msra.mxu0 %v189
    %225 = vmatprep.subr.mxu0 0.0
    %226 = vmatpush1.msra.mxu0 %v190
    %227 = vmatprep.subr.mxu0 0.0
    %228 = vmatpush1.msra.mxu0 %v191
    %229 = vmatprep.subr.mxu0 0.0
    %230 = vmatpush1.msra.mxu0 %v192
    %231 = vmatprep.subr.mxu0 0.0
    %232 = vmatpush1.msra.mxu0 %v193
    %233 = vmatprep.subr.mxu0 0.0
    %234 = vmatpush1.msra.mxu0 0.0
    %235 = vmatprep.subr.mxu0 0.0
    %236 = vmatpush1.msra.mxu0 0.0
    %237 = vmatprep.subr.mxu0 0.0
    %238 = vmatpush1.msra.mxu0 0.0
    %239 = vmatprep.subr.mxu0 0.0
    %240 = vmatpush1.msra.mxu0 0.0
    %241 = vmatprep.subr.mxu0 0.0
    %242 = vmatpush1.msra.mxu0 0.0
    %243 = vmatprep.subr.mxu0 0.0
    %244 = vmatpush1.msra.mxu0 0.0
    %245 = vmatprep.subr.mxu0 0.0
    %246 = vmatpush1.msra.mxu0 0.0
    %247 = vmatprep.subr.mxu0 0.0
    %248 = vmatpush1.msra.mxu0 0.0
    %249 = vmatprep.subr.mxu0 0.0
    %250 = vmatpush1.msra.mxu0 0.0
    %251 = vmatprep.subr.mxu0 0.0
    %252 = vmatpush1.msra.mxu0 0.0
    %253 = vmatprep.subr.mxu0 0.0
    %254 = vmatpush1.msra.mxu0 0.0
    %255 = vmatprep.subr.mxu0 0.0
    %256 = vmatpush1.msra.mxu0 0.0
    %257 = vmatprep.subr.mxu0 0.0
    %258 = vmatpush1.msra.mxu0 0.0
    %259 = vmatprep.subr.mxu0 0.0
    %260 = vmatpush1.msra.mxu0 0.0
    %261 = vmatprep.subr.mxu0 0.0
    %262 = vmatpush1.msra.mxu0 0.0
    %263 = vmatprep.subr.mxu0 0.0
    %264 = vmatpush1.msra.mxu0 0.0
    %265 = vmatprep.mubr.f32.mxu0 0.0
    %266 = vmatmul.mubr.f32.gmra.mrb[0].mxu0 %v177
    %v267 = vpop.f32.mrb[0].mxu0
    %v268 = vadd.f32 %v199, %v267
    %v269 = vpop.f32.mrb[0].mxu0
    %270 = vdwg.mxu0
    %v271 = vtanh.pop %v268
    %v272 = vld [vmem:[#allocation8] sm:$0xff]
    %v273 = vld [vmem:[#allocation8 + $0x8] sm:$0xff]
    %v274 = vld [vmem:[#allocation8 + $0x10] sm:$0xff]
    %v275 = vld [vmem:[#allocation8 + $0x18] sm:$0xff]
    %v276 = vld [vmem:[#allocation8 + $0x20] sm:$0xff]
    %v277 = vld [vmem:[#allocation8 + $0x28] sm:$0xff]
    %v278 = vld [vmem:[#allocation8 + $0x30] sm:$0xff]
    %v279 = vld [vmem:[#allocation8 + $0x38] sm:$0xff]
    %v280 = vld [vmem:[#allocation8 + $0x40] sm:$0xff]
    %v281 = vld [vmem:[#allocation8 + $0x48] sm:$0xff]
    %v282 = vld [vmem:[#allocation8 + $0x50] sm:$0xff]
    %v283 = vld [vmem:[#allocation8 + $0x58] sm:$0xff]
    %v284 = vld [vmem:[#allocation8 + $0x60] sm:$0xff]
    %v285 = vld [vmem:[#allocation8 + $0x68] sm:$0xff]
    %v286 = vld [vmem:[#allocation8 + $0x70] sm:$0xff]
    %v287 = vld [vmem:[#allocation8 + $0x78] sm:$0xff]
    %v288 = vld [vmem:[#allocation8 + $0x80] sm:$0xff]
    %v289 = vld [vmem:[#allocation8 + $0x88] sm:$0xff]
    %v290 = vld [vmem:[#allocation8 + $0x90] sm:$0xff]
    %v291 = vld [vmem:[#allocation8 + $0x98] sm:$0xff]
    %v292 = vld [vmem:[#allocation8 + $0xa0] sm:$0xff]
    %v293 = vld [vmem:[#allocation8 + $0xa8] sm:$0xff]
    %v294 = vld [vmem:[#allocation8 + $0xb0] sm:$0xff]
    %v295 = vld [vmem:[#allocation8 + $0xb8] sm:$0xff]
    %v296 = vld [vmem:[#allocation8 + $0xc0] sm:$0xff]
    %v297 = vld [vmem:[#allocation8 + $0xc8] sm:$0xff]
    %v298 = vld [vmem:[#allocation8 + $0xd0] sm:$0xff]
    %v299 = vld [vmem:[#allocation8 + $0xd8] sm:$0xff]
    %v300 = vld [vmem:[#allocation8 + $0xe0] sm:$0xff]
    %v301 = vld [vmem:[#allocation8 + $0xe8] sm:$0xff]
    %v302 = vld [vmem:[#allocation8 + $0xf0] sm:$0xff]
    %v303 = vld [vmem:[#allocation8 + $0xf8] sm:$0xff]
    %v304 = vld [vmem:[%s6] sm:$0x3]
    %v306 = vlaneseq
    %v307 = vshrl.u32 %v306, 7
    %v308 = vsub.s32 0, %v307
    %v309 = vrot.slane %v304, %v308
    %v310 = vlaneseq
    %v311 = vshrl.u32 %v310, 7
    %v312 = vsub.s32 1, %v311
    %v313 = vrot.slane %v304, %v312
    %316 = vmatprep.subr.mxu0 %v273
    %317 = vmatpush1.msra.mxu0 %v272
    %318 = vmatprep.subr.mxu0 %v275
    %319 = vmatpush1.msra.mxu0 %v274
    %320 = vmatprep.subr.mxu0 %v277
    %321 = vmatpush1.msra.mxu0 %v276
    %322 = vmatprep.subr.mxu0 %v279
    %323 = vmatpush1.msra.mxu0 %v278
    %324 = vmatprep.subr.mxu0 %v281
    %325 = vmatpush1.msra.mxu0 %v280
    %326 = vmatprep.subr.mxu0 %v283
    %327 = vmatpush1.msra.mxu0 %v282
    %328 = vmatprep.subr.mxu0 %v285
    %329 = vmatpush1.msra.mxu0 %v284
    %330 = vmatprep.subr.mxu0 %v287
    %331 = vmatpush1.msra.mxu0 %v286
    %332 = vmatprep.subr.mxu0 %v289
    %333 = vmatpush1.msra.mxu0 %v288
    %334 = vmatprep.subr.mxu0 %v291
    %335 = vmatpush1.msra.mxu0 %v290
    %336 = vmatprep.subr.mxu0 %v293
    %337 = vmatpush1.msra.mxu0 %v292
    %338 = vmatprep.subr.mxu0 %v295
    %339 = vmatpush1.msra.mxu0 %v294
    %340 = vmatprep.subr.mxu0 %v297
    %341 = vmatpush1.msra.mxu0 %v296
    %342 = vmatprep.subr.mxu0 %v299
    %343 = vmatpush1.msra.mxu0 %v298
    %344 = vmatprep.subr.mxu0 %v301
    %345 = vmatpush1.msra.mxu0 %v300
    %346 = vmatprep.subr.mxu0 %v303
    %347 = vmatpush1.msra.mxu0 %v302
    %348 = vmatprep.subr.mxu0 0.0
    %349 = vmatpush1.msra.mxu0 0.0
    %350 = vmatprep.subr.mxu0 0.0
    %351 = vmatpush1.msra.mxu0 0.0
    %352 = vmatprep.subr.mxu0 0.0
    %353 = vmatpush1.msra.mxu0 0.0
    %354 = vmatprep.subr.mxu0 0.0
    %355 = vmatpush1.msra.mxu0 0.0
    %356 = vmatprep.subr.mxu0 0.0
    %357 = vmatpush1.msra.mxu0 0.0
    %358 = vmatprep.subr.mxu0 0.0
    %359 = vmatpush1.msra.mxu0 0.0
    %360 = vmatprep.subr.mxu0 0.0
    %361 = vmatpush1.msra.mxu0 0.0
    %362 = vmatprep.subr.mxu0 0.0
    %363 = vmatpush1.msra.mxu0 0.0
    %364 = vmatprep.subr.mxu0 0.0
    %365 = vmatpush1.msra.mxu0 0.0
    %366 = vmatprep.subr.mxu0 0.0
    %367 = vmatpush1.msra.mxu0 0.0
    %368 = vmatprep.subr.mxu0 0.0
    %369 = vmatpush1.msra.mxu0 0.0
    %370 = vmatprep.subr.mxu0 0.0
    %371 = vmatpush1.msra.mxu0 0.0
    %372 = vmatprep.subr.mxu0 0.0
    %373 = vmatpush1.msra.mxu0 0.0
    %374 = vmatprep.subr.mxu0 0.0
    %375 = vmatpush1.msra.mxu0 0.0
    %376 = vmatprep.subr.mxu0 0.0
    %377 = vmatpush1.msra.mxu0 0.0
    %378 = vmatprep.subr.mxu0 0.0
    %379 = vmatpush1.msra.mxu0 0.0
    %380 = vmatprep.mubr.f32.mxu0 0.0
    %381 = vmatmul.mubr.f32.gmra.mrb[0].mxu0 %v271
    %v382 = vpop.f32.mrb[0].mxu0
    %v383 = vadd.f32 %v309, %v382
    %v384 = vpop.f32.mrb[0].mxu0
    %v385 = vadd.f32 %v313, %v384
    %386 = vdwg.mxu0
    %v387 = vmax.f32 %v385, -20.0
    %v388 = vmin.f32 %v387, 20.0
    %v389 = vmul.f32 %v388, 0.5
    %v390 = vmul.f32 %v389, 1.442695
    %v391 = vpow.pop %v390
    %v392 = vld [vmem:[%s7] sm:$0xff]
    %v393 = vmul.f32 %v392, %v391
    %v394 = vadd.f32 %v393, %v383
    %395 = vst [vmem:[#allocation10] sm:$0xff] %v394
    %396 = vst [vmem:[#allocation10 + $0x8] sm:$0xff] %v383
    %397 = vst [vmem:[#allocation10 + $0x10] sm:$0xff] %v388
    // Predicated region
    $region50: #{tpu_custom_call.1} parent=1 // pred_check
      _
    $region51: #{tpu_custom_call.1} parent=1 // pred_check_branch
      %399 = sbr.rel (0) target = $region53
    $region52: #{tpu_custom_call.1} parent=1 // pred_region
      %s401 = ssub.s32 384, 384
      %402 = vsyncadd [#allocation4], %s401
      %s404 = sshll.u32 [#allocation10], 4
      %s405 = int_to_ptr.vmem [resolvable:$true] %s404
      %407 = dma.vmem_to_hbm [thread:$0]  %s405, 384, %s8, [#allocation4]
    $region53: #{tpu_custom_call.1} parent=1 // pred_fallthru
      _
    // Predicated region
    $region54: #{tpu_custom_call.1} parent=1 // pred_check
      _
    $region55: #{tpu_custom_call.1} parent=1 // pred_check_branch
      %409 = sbr.rel (0) target = $region57
    $region56: #{tpu_custom_call.1} parent=1 // pred_region
      %410 = dma.done [#allocation4], 384
    $region57: #{tpu_custom_call.1} parent=1 // pred_fallthru
      _
    %411 = vsyncpa [#allocation3], 1
    %412 = vsyncpa [#allocation6], 1
    %413 = vsyncpa [#allocation9], 1
    %414 = vsyncpa [#allocation4], 1

</llo_original>
